<compile_context>
chip_gen: v7x
topology: tpu7x:2x2x1
jax: 0.10.0
libtpu: 0.0.40
codegen_flags: <defaults>
</compile_context>

<pallas_src>
import functools

import jax
import jax.numpy as jnp
from jax.experimental import pallas as pl
from jax.experimental.pallas import tpu as pltpu


def _round_up(v, m):
    return ((v + m - 1) // m) * m


def _device_kind():
    try:
        return jax.devices()[0].device_kind.lower()
    except Exception:  # defensive: no device visible at trace time
        return ""


def _default_block_bytes():
    # Pure HBM streaming: the only cost besides bytes is ~0.35us per grid
    # step, so the tile DMA must dominate that overhead.  4 MiB tiles put
    # v5e/v6e within ~10-15% of their HBM roofline; v7x's ~3.2 TB/s HBM wants
    # >=8 MiB tiles (double-buffered that is 16 MiB, comfortably inside VMEM).
    return (8 << 20) if "v7" in _device_kind() else (4 << 20)


def _default_n_splits():
    # One split per TensorCore: v7x has 2 TCs/chip, v5e/v6e have 1 (where a
    # split would only add a clamped duplicate tile read and an extra row).
    # TODO(synk): confirm with an xprof trace that the outer "parallel" axis
    # really shards across v7x's two TCs; if not, switch to pltpu.CORE_PARALLEL.
    return 2 if "v7" in _device_kind() else 1


def _partial_sum_kernel(x_ref, o_ref, acc_ref, *,
                        steps, num_blocks, block_rows, total_rows,
                        has_pad_iters, has_ragged_last):
    c = pl.program_id(0)          # split index (one per core on multi-TC chips)
    s = pl.program_id(1)          # sequential streaming step within this split

    @pl.when(s == 0)
    def _init():
        acc_ref[...] = jnp.zeros_like(acc_ref)

    b = c * steps + s             # logical row-block index

    def _accum(x):
        # pure VPU adds: fold the (block_rows,128) tile's sublane groups into
        # the (8,128) accumulator; no cross-lane / cross-sublane XLU work.
        acc_ref[...] += jnp.sum(x.reshape(block_rows // 8, 8, 128), axis=0)

    # Hot path: full (unmasked) blocks are a plain cast-on-load + add.
    num_full = num_blocks - 1 if has_ragged_last else num_blocks
    if has_pad_iters or has_ragged_last:
        @pl.when(b < num_full)
        def _full():
            _accum(x_ref[...].astype(jnp.float32))
    else:
        _accum(x_ref[...].astype(jnp.float32))

    if has_ragged_last:
        # Only the single last block pays for the row mask (runtime-gated);
        # garbage rows past the array extent are zeroed before accumulation.
        @pl.when(b == num_blocks - 1)
        def _ragged():
            x = x_ref[...].astype(jnp.float32)
            row = b * block_rows + jax.lax.broadcasted_iota(jnp.int32, x.shape, 0)
            _accum(jnp.where(row < total_rows, x, jnp.float32(0.0)))

    @pl.when(s == steps - 1)
    def _finalize():
        o_ref[...] = acc_ref[...]


def neg_mean_pallas(x, *, block_bytes=None, n_splits=None):
    """-mean(x) via a Pallas streaming reduction. Returns an f32 scalar."""
    lane = 128
    n = x.size
    flat = x.reshape(-1)                       # native dtype: free for contiguous x

    rows = n // lane
    rem = n - rows * lane
    if rows == 0:                              # degenerate: nothing to tile
        return -(jnp.sum(flat.astype(jnp.float32)) / jnp.float32(n))

    # <128-element remainder summed in the wrapper (tiny).  Note: when
    # n % 128 != 0 the flat[:rows*lane] slice below materializes an HBM copy;
    # the public neg_mean() wrapper routes such sizes to the XLA fallback.
    tail = (jnp.sum(flat[rows * lane:].astype(jnp.float32))
            if rem else jnp.float32(0.0))
    main = (flat[: rows * lane] if rem else flat).reshape(rows, lane)

    itemsize = jnp.dtype(x.dtype).itemsize
    if block_bytes is None:
        block_bytes = _default_block_bytes()
    # Tile size in NATIVE bytes (so bf16 keeps the same DMA size as f32);
    # rows kept a multiple of 8 for the (8,128) vreg-group accumulator.
    block_rows = max(8, (block_bytes // (lane * itemsize)) // 8 * 8)
    block_rows = min(block_rows, _round_up(rows, 8))
    assert block_rows % 8 == 0

    num_blocks = pl.cdiv(rows, block_rows)
    if n_splits is None:
        n_splits = _default_n_splits()
    n_splits = max(1, min(n_splits, num_blocks))
    steps = pl.cdiv(num_blocks, n_splits)

    has_pad_iters = n_splits * steps != num_blocks
    has_ragged_last = (rows % block_rows) != 0

    kernel = functools.partial(
        _partial_sum_kernel,
        steps=steps, num_blocks=num_blocks, block_rows=block_rows,
        total_rows=rows, has_pad_iters=has_pad_iters,
        has_ragged_last=has_ragged_last)

    def in_map(c, s):
        b = c * steps + s
        if has_pad_iters:
            # padded iterations re-read the last valid block; their compute is
            # skipped in-kernel via pl.when
            b = jnp.minimum(b, num_blocks - 1)
        return (b, 0)

    # VMEM budget: double-buffered native-dtype input tiles + an f32 staging
    # copy for the cast + headroom; capped below v7x's 64 MiB physical VMEM.
    vmem_limit = 2 * block_rows * lane * itemsize + block_rows * lane * 4 + (2 << 20)
    vmem_limit = int(min(max(vmem_limit, 16 << 20), 48 << 20))

    partials = pl.pallas_call(
        kernel,
        out_shape=jax.ShapeDtypeStruct((n_splits * 8, lane), jnp.float32),
        grid_spec=pltpu.PrefetchScalarGridSpec(
            num_scalar_prefetch=0,
            grid=(n_splits, steps),
            in_specs=[pl.BlockSpec((block_rows, lane), in_map)],
            out_specs=pl.BlockSpec((8, lane), lambda c, s: (c, 0)),
            scratch_shapes=[pltpu.VMEM((8, lane), jnp.float32)]),
        compiler_params=pltpu.CompilerParams(
            # outer axis shards across TensorCores on multi-core chips (v7x);
            # inner axis is the sequential streaming reduction
            dimension_semantics=("parallel", "arbitrary"),
            vmem_limit_bytes=vmem_limit),
    )(main)

    total = jnp.sum(partials, dtype=jnp.float32) + tail
    return -(total / jnp.float32(n))


def neg_mean(x, *, min_pallas_bytes=4 << 20):
    """G_loss forward: -mean(DGz).

    Routes tiny inputs (fixed per-step Pallas overhead dominates) and
    numel % 128 != 0 inputs (the wrapper slice would materialize a full-size
    HBM copy) to the fused XLA -mean, which is itself near roofline there."""
    n = x.size
    if n * jnp.dtype(x.dtype).itemsize < min_pallas_bytes or n % 128 != 0:
        return -jnp.mean(x.astype(jnp.float32))
    return neg_mean_pallas(x)


if __name__ == "__main__":
    key = jax.random.PRNGKey(0)

    # Discriminator-of-generated output D(G(z)); NCHW-like small shape.
    DGz = jax.random.normal(key, (2, 4, 16, 16), dtype=jnp.float32)

    # exercise the Pallas kernel directly (the public `neg_mean` would send a
    # tensor this small down the plain -jnp.mean fast path)
    loss = jax.block_until_ready(neg_mean_pallas(DGz))
    ref = -jnp.mean(DGz)
    assert jnp.allclose(loss, ref, atol=1e-5, rtol=1e-5), (loss, ref)

    # public wrapper (small-input fallback) must agree as well
    loss2 = jax.block_until_ready(neg_mean(DGz))
    assert jnp.allclose(loss2, ref, atol=1e-5, rtol=1e-5), (loss2, ref)

    # multi-step streaming path (several full tiles, no masking)
    k1, k2 = jax.random.split(key)
    big = jax.random.normal(k1, (8, 64, 64, 64), dtype=jnp.float32)
    loss3 = jax.block_until_ready(neg_mean_pallas(big, block_bytes=1 << 20))
    ref3 = -jnp.mean(big)
    assert jnp.allclose(loss3, ref3, atol=1e-5, rtol=1e-5), (loss3, ref3)

    # ragged last block + padded split iterations (mask / skip paths)
    ragged = jax.random.normal(k2, (2, 3, 40, 128), dtype=jnp.float32)
    loss4 = jax.block_until_ready(
        neg_mean_pallas(ragged, block_bytes=32 << 10, n_splits=3))
    ref4 = -jnp.mean(ragged)
    assert jnp.allclose(loss4, ref4, atol=1e-5, rtol=1e-5), (loss4, ref4)

    print("KERNEL_OK")
</pallas_src>

<mosaic_0001>
module attributes {stable_mosaic.version = 11 : i64} {
  func.func @_partial_sum_kernel(%arg0: i32, %arg1: i32, %arg2: memref<16x128xf32, #tpu.memory_space<vmem>>, %arg3: memref<8x128xf32, #tpu.memory_space<vmem>>, %arg4: memref<8x128xf32, #tpu.memory_space<vmem>>) attributes {dimension_semantics = [#tpu.dimension_semantics<parallel>, #tpu.dimension_semantics<arbitrary>], iteration_bounds = array<i64: 1, 1>, scalar_prefetch = 0 : i64, scratch_operands = 1 : i64, tpu.core_type = #tpu.core_type<tc>, window_params = [{transform_indices = @transform_0, window_bounds = array<i64: 16, 128>}, {transform_indices = @transform_1, window_bounds = array<i64: 8, 128>}]} {
    %c0_i32 = arith.constant 0 : i32
    %0 = arith.cmpi eq, %arg1, %c0_i32 : i32
    %1 = arith.extui %0 : i1 to i32
    %c0_i32_0 = arith.constant 0 : i32
    %2 = arith.cmpi ne, %1, %c0_i32_0 : i32
    scf.if %2 {
      %cst_8 = arith.constant 0.000000e+00 : f32
      %12 = vector.broadcast %cst_8 : f32 to vector<8x128xf32>
      %c0_9 = arith.constant 0 : index
      %c0_10 = arith.constant 0 : index
      %13 = vector.load %arg4[%c0_9, %c0_10] : memref<8x128xf32, #tpu.memory_space<vmem>>, vector<8x128xf32>
      tpu.vector_store %arg4[%c0_9, %c0_10], %12 {strides = array<i32>} : memref<8x128xf32, #tpu.memory_space<vmem>>, vector<8x128xf32>,
    } else {
    }
    %c0 = arith.constant 0 : index
    %c0_1 = arith.constant 0 : index
    %3 = vector.load %arg2[%c0, %c0_1] : memref<16x128xf32, #tpu.memory_space<vmem>>, vector<16x128xf32>
    %c0_2 = arith.constant 0 : index
    %c0_3 = arith.constant 0 : index
    %4 = vector.load %arg4[%c0_2, %c0_3] : memref<8x128xf32, #tpu.memory_space<vmem>>, vector<8x128xf32>
    %5 = vector.shape_cast %3 : vector<16x128xf32> to vector<2x8x128xf32>
    %cst = arith.constant dense<0.000000e+00> : vector<8x128xf32>
    %6 = vector.multi_reduction <add>, %5, %cst [0] : vector<2x8x128xf32> to vector<8x128xf32>
    %7 = arith.addf %4, %6 : vector<8x128xf32>
    %c0_4 = arith.constant 0 : index
    %c0_5 = arith.constant 0 : index
    %8 = vector.load %arg4[%c0_4, %c0_5] : memref<8x128xf32, #tpu.memory_space<vmem>>, vector<8x128xf32>
    tpu.vector_store %arg4[%c0_4, %c0_5], %7 {strides = array<i32>} : memref<8x128xf32, #tpu.memory_space<vmem>>, vector<8x128xf32>,
    %c0_i32_6 = arith.constant 0 : i32
    %9 = arith.cmpi eq, %arg1, %c0_i32_6 : i32
    %10 = arith.extui %9 : i1 to i32
    %c0_i32_7 = arith.constant 0 : i32
    %11 = arith.cmpi ne, %10, %c0_i32_7 : i32
    scf.if %11 {
      %c0_8 = arith.constant 0 : index
      %c0_9 = arith.constant 0 : index
      %12 = vector.load %arg4[%c0_8, %c0_9] : memref<8x128xf32, #tpu.memory_space<vmem>>, vector<8x128xf32>
      %c0_10 = arith.constant 0 : index
      %c0_11 = arith.constant 0 : index
      %13 = vector.load %arg3[%c0_10, %c0_11] : memref<8x128xf32, #tpu.memory_space<vmem>>, vector<8x128xf32>
      tpu.vector_store %arg3[%c0_10, %c0_11], %12 {strides = array<i32>} : memref<8x128xf32, #tpu.memory_space<vmem>>, vector<8x128xf32>,
    } else {
    }
    return
  }
  func.func @transform_0(%arg0: i32, %arg1: i32) -> (i32, i32) {
    %c1_i32 = arith.constant 1 : i32
    %0 = arith.muli %arg0, %c1_i32 : i32
    %1 = arith.addi %0, %arg1 : i32
    %c0_i32 = arith.constant 0 : i32
    %c0_i32_0 = arith.constant 0 : i32
    return %1, %c0_i32 : i32, i32
  }
  func.func @transform_1(%arg0: i32, %arg1: i32) -> (i32, i32) {
    %c0_i32 = arith.constant 0 : i32
    %c0_i32_0 = arith.constant 0 : i32
    return %arg0, %c0_i32 : i32, i32
  }
}

</mosaic_0001>

<llo_original>
// kernel: tpu_custom_call.1
$region0: #{tpu_custom_call.1}
  #allocation0 [shape = 'u32[]', space=smem, size = 0x4, offset = 0x4, fixed_abs, tag = 'smem constant byte address 0x4 - core index']
  #allocation1 [shape = 'u32[144,128]{1,0:T(1,128)}', space=vmem, size = 0x12000, scoped, tag = 'internal scratch']
  #allocation2 [shape = 'f32[8,128]{1,0:T(8,128)}', space=vmem, size = 0x1000, scoped, tag = 'scratch operand']
  %s0 = inlined_call_operand.hbm [shape: f32[16,128], index: 0, kind: input, shape index: {}]
  %s1 = inlined_call_operand.hbm [shape: f32[8,128], index: 1, kind: output, shape index: {}]
  %s2 = sld [smem:[#allocation0]]
  $region26: #{tpu_custom_call.1} parent=0
    _
  %s4 = ssub.s32 1, %s2
  %s5 = scalar_select 0, %s4, %s2
  $region1: #{tpu_custom_call.1} parent=0
    #allocation3 [shape = 'u8[8192]{0}', space=vmem, size = 0x2000, scoped, tag = 'input window, operand 0, single buffered']
    #allocation4 [shape = 's32[1]{0}', space=sflag, size = 0x4, scoped, tag = 'scoped memory for tpu_custom_call.1']
    #allocation5 [shape = 's32[1]{0}', space=sflag, size = 0x4, scoped, tag = 'scoped memory for tpu_custom_call.1']
    #allocation6 [shape = 'u8[4096]{0}', space=vmem, size = 0x1000, scoped, tag = 'output window, operand 0, single buffered']
    %6 = vsyncpa [#allocation4], 0
    %7 = vsyncpa [#allocation5], 0
    // Predicated region
    $region2: #{tpu_custom_call.1} parent=1 // pred_check
      _
    $region3: #{tpu_custom_call.1} parent=1 // pred_check_branch
      %9 = sbr.rel (0) target = $region5
    $region4: #{tpu_custom_call.1} parent=1 // pred_region
      %s10 = sadd.s32 0, 0
      %s11 = smul.u32 2, %s10
      %s13 = ssub.s32 256, 256
      %14 = vsyncadd [#allocation4], %s13
      %s15 = smul.addr %s11, 128
      %s16 = scalar_lea.hbm %s0, %s15
      %s17 = sshll.u32 [#allocation3], 4
      %s18 = int_to_ptr.vmem [resolvable:$true] %s17
      %23 = dma.hbm_to_vmem [thread:$0]  %s16, 256, %s18, [#allocation4], 128, 128, 8
    $region5: #{tpu_custom_call.1} parent=1 // pred_fallthru
      _
    // Predicated region
    $region6: #{tpu_custom_call.1} parent=1 // pred_check
      _
    $region7: #{tpu_custom_call.1} parent=1 // pred_check_branch
      %25 = sbr.rel (0) target = $region9
    $region8: #{tpu_custom_call.1} parent=1 // pred_region
      %26 = dma.done [#allocation4], 256
    $region9: #{tpu_custom_call.1} parent=1 // pred_fallthru
      _
    %s27 = sadd.s32 0, 0
    %s28 = smul.u32 2, %s27
    %p29 = scmp.eq.s32.totalorder 0, 0
    // Predicated region
    $region10: #{tpu_custom_call.1} parent=1 // pred_check
      %p30 = pneg %p29
    $region11: #{tpu_custom_call.1} parent=1 // pred_check_branch
      %32 = sbr.rel (%p30) target = $region13
    $region12: #{tpu_custom_call.1} parent=1 // pred_region
      %33 = vst [vmem:[#allocation2] sm:$0xff] 0.0
    $region13: #{tpu_custom_call.1} parent=1 // pred_fallthru
      _
    %v34 = vld [vmem:[#allocation3] sm:$0xff]
    %v35 = vld [vmem:[#allocation3 + $0x8] sm:$0xff]
    %v36 = vld [vmem:[#allocation2] sm:$0xff]
    %v37 = vadd.f32 %v34, %v35
    %v38 = vadd.f32 %v36, %v37
    %39 = vst [vmem:[#allocation2] sm:$0xff] %v38
    // Predicated region
    $region14: #{tpu_custom_call.1} parent=1 // pred_check
      %p40 = pneg %p29
    $region15: #{tpu_custom_call.1} parent=1 // pred_check_branch
      %42 = sbr.rel (%p40) target = $region17
    $region16: #{tpu_custom_call.1} parent=1 // pred_region
      %v43 = vld [vmem:[#allocation2] sm:$0xff]
      %44 = vst [vmem:[#allocation6] sm:$0xff] %v43
    $region17: #{tpu_custom_call.1} parent=1 // pred_fallthru
      _
    // Predicated region
    $region18: #{tpu_custom_call.1} parent=1 // pred_check
      _
    $region19: #{tpu_custom_call.1} parent=1 // pred_check_branch
      %46 = sbr.rel (0) target = $region21
    $region20: #{tpu_custom_call.1} parent=1 // pred_region
      %s48 = ssub.s32 128, 128
      %49 = vsyncadd [#allocation5], %s48
      %s51 = sshll.u32 [#allocation6], 4
      %s52 = int_to_ptr.vmem [resolvable:$true] %s51
      %54 = dma.vmem_to_hbm [thread:$0]  %s52, 128, %s1, [#allocation5]
    $region21: #{tpu_custom_call.1} parent=1 // pred_fallthru
      _
    // Predicated region
    $region22: #{tpu_custom_call.1} parent=1 // pred_check
      _
    $region23: #{tpu_custom_call.1} parent=1 // pred_check_branch
      %56 = sbr.rel (0) target = $region25
    $region24: #{tpu_custom_call.1} parent=1 // pred_region
      %57 = dma.done [#allocation5], 128
    $region25: #{tpu_custom_call.1} parent=1 // pred_fallthru
      _
    %58 = vsyncpa [#allocation4], 1
    %59 = vsyncpa [#allocation5], 1

</llo_original>
